<compile_context>
chip_gen: v7x
topology: tpu7x:2x2x1
jax: 0.10.0
libtpu: 0.0.40
codegen_flags: <defaults>
</compile_context>

<pallas_src>
import math

import jax
import jax.numpy as jnp
from jax import lax
from jax.experimental import pallas as pl
from jax.experimental.pallas import tpu as pltpu


NEG_INF = -1e30  # large finite negative: avoids inf-inf NaN corner cases


def _round_up(x, m):
    return ((x + m - 1) // m) * m


def _pick_tile(n, candidates):
    for c in candidates:
        if c <= n and n % c == 0:
            return c
    return n


# --------------------------------------------------------------------------
# Kernel 1: fused QKV projection, head-major output, d_in-reduction accumulator.
#   grid = (B, T_tiles, 3*H, d_in_tiles)
#   x_ref : (1, tt, tkin) bf16
#   w_ref : (1, tkin, hd) bf16   (per-head slice of packed [Wq*scale|Wk|Wv])
#   o_ref : (1, 1, tt, hd) bf16  (head-major (B, 3H, T, hd) output)
#   acc   : (tt, hd) f32 scratch
# --------------------------------------------------------------------------
def qkv_proj_kernel(x_ref, w_ref, o_ref, acc_ref):
    k = pl.program_id(3)

    @pl.when(k == 0)
    def _init():
        acc_ref[...] = jnp.zeros_like(acc_ref)

    acc_ref[...] += jnp.dot(
        x_ref[0], w_ref[0], preferred_element_type=jnp.float32
    )

    @pl.when(k == pl.num_programs(3) - 1)
    def _store():
        o_ref[0, 0] = acc_ref[...].astype(o_ref.dtype)


# --------------------------------------------------------------------------
# Kernel 2: flash attention over a triangular (qi, ki) grid + fused out_proj.
#   qi_tbl / ki_tbl : (n_tri,) int32 in SMEM (scalar prefetch)
#   q_ref/k_ref/v_ref : (1, H, tq|tk, hd) bf16 (q pre-scaled by 1/sqrt(hd))
#   wo_ref : (H, hd, d_out) bf16,  bo_ref : (1, d_out) f32
#   o_ref  : (1, tq, d_out)
#   scratch: m (H,tq,1), l (H,tq,1), acc (H,tq,hd)  -- all f32
# --------------------------------------------------------------------------
def attn_kernel(qi_tbl, ki_tbl, q_ref, k_ref, v_ref, wo_ref, bo_ref, o_ref,
                m_ref, l_ref, acc_ref):
    t = pl.program_id(1)
    qi = qi_tbl[t]
    ki = ki_tbl[t]
    tq = q_ref.shape[2]
    tk = k_ref.shape[2]

    @pl.when(ki == 0)
    def _init():
        m_ref[...] = jnp.full_like(m_ref, NEG_INF)
        l_ref[...] = jnp.zeros_like(l_ref)
        acc_ref[...] = jnp.zeros_like(acc_ref)

    q = q_ref[0]  # (H, tq, hd) bf16, already scaled by 1/sqrt(hd)
    k = k_ref[0]  # (H, tk, hd)
    v = v_ref[0]  # (H, tk, hd)
    s = jnp.einsum("hqd,hkd->hqk", q, k,
                   preferred_element_type=jnp.float32)        # (H, tq, tk) f32

    def _online_softmax_update(scores):
        m_prev = m_ref[...]
        m_new = jnp.maximum(m_prev, scores.max(axis=-1, keepdims=True))
        alpha = jnp.exp(m_prev - m_new)
        p = jnp.exp(scores - m_new)                            # unnormalized
        l_ref[...] = alpha * l_ref[...] + p.sum(axis=-1, keepdims=True)
        acc_ref[...] = alpha * acc_ref[...] + jnp.einsum(
            "hqk,hkd->hqd", p.astype(v.dtype), v,
            preferred_element_type=jnp.float32)
        m_ref[...] = m_new

    # Off-diagonal tiles (ki < qi): fully valid, no mask work at all.
    @pl.when(ki < qi)
    def _off_diag():
        _online_softmax_update(s)

    # Diagonal tile (ki == qi): within-tile causal mask, then (since the
    # triangular ordering makes the diagonal the LAST kv step for this q tile)
    # normalize, fuse the output projection, and store.
    @pl.when(ki == qi)
    def _diag():
        row = lax.broadcasted_iota(jnp.int32, (tq, tk), 0)
        col = lax.broadcasted_iota(jnp.int32, (tq, tk), 1)
        _online_softmax_update(jnp.where((col > row)[None, :, :], NEG_INF, s))

        ctx = acc_ref[...] / l_ref[...]                        # exact normalize
        # out_proj = sum_h ctx_h @ Wo_h  (no in-kernel transpose/reshape).
        out = jnp.einsum("hqd,hde->hqe", ctx.astype(jnp.bfloat16), wo_ref[...],
                         preferred_element_type=jnp.float32)   # (H, tq, d_out)
        o_ref[0] = (out.sum(axis=0) + bo_ref[...]).astype(o_ref.dtype)

    # TODO(synk): attention-weight dropout omitted (eval semantics / p=0.0).
    # TODO(synk): for very large d_out on v7x (64 MiB VMEM) hoist the out_proj
    #             into a separate d_out-tiled matmul kernel instead of keeping
    #             the full (H, hd, d_out) Wo block resident.


def mha_forward(x, wq_t, wk_t, wv_t, wo_t, bo, num_heads, q_tile=256):
    """x: (B, T, d_in); w*_t: (in, out) transposed Linear weights; bo: (1, d_out)."""
    B, T, d_in = x.shape
    d_out = wq_t.shape[1]
    H = num_heads
    hd = d_out // H
    scale = 1.0 / math.sqrt(hd)

    # ---- tiling (pad T instead of falling back to a single huge tile) ----
    # On v6e, q_tile=512 is closer to the HBM roofline once VPU work is trimmed;
    # 256 is a safe default across v5e/v6e/v7x.
    tq = q_tile if T >= q_tile else _round_up(T, 8)
    tk = tq
    Tp = _round_up(T, tq)
    nq = Tp // tq
    tkin = _pick_tile(d_in, (512, 256, 128))

    x_p = x if Tp == T else jnp.pad(x, ((0, 0), (0, Tp - T), (0, 0)))
    x_bf = x_p.astype(jnp.bfloat16)

    # ---- per-head packed QKV weights (3H, d_in, hd); scale folded into Q ----
    wq_h = (wq_t * scale).reshape(d_in, H, hd).transpose(1, 0, 2)
    wk_h = wk_t.reshape(d_in, H, hd).transpose(1, 0, 2)
    wv_h = wv_t.reshape(d_in, H, hd).transpose(1, 0, 2)
    w_heads = jnp.concatenate([wq_h, wk_h, wv_h], axis=0).astype(jnp.bfloat16)

    # ---- Kernel 1: QKV projection straight into head-major (B, 3H, Tp, hd) ----
    qkv = pl.pallas_call(
        qkv_proj_kernel,
        out_shape=jax.ShapeDtypeStruct((B, 3 * H, Tp, hd), jnp.bfloat16),
        grid=(B, Tp // tq, 3 * H, d_in // tkin),
        in_specs=[
            pl.BlockSpec((1, tq, tkin), lambda b, i, j, k: (b, i, k)),
            pl.BlockSpec((1, tkin, hd), lambda b, i, j, k: (j, k, 0)),
        ],
        out_specs=pl.BlockSpec((1, 1, tq, hd), lambda b, i, j, k: (b, j, i, 0)),
        scratch_shapes=[pltpu.VMEM((tq, hd), jnp.float32)],
        compiler_params=pltpu.CompilerParams(
            dimension_semantics=("parallel", "parallel", "parallel", "arbitrary"),
            vmem_limit_bytes=64 * 1024 * 1024),
    )(x_bf, w_heads)

    # ---- triangular step tables: for each qi, kv tiles 0..qi (diagonal last) ----
    qi_list, ki_list = [], []
    for q_i in range(nq):
        for k_i in range(q_i + 1):
            qi_list.append(q_i)
            ki_list.append(k_i)
    qi_tbl = jnp.array(qi_list, dtype=jnp.int32)
    ki_tbl = jnp.array(ki_list, dtype=jnp.int32)
    n_tri = len(qi_list)

    wo_r = wo_t.reshape(H, hd, d_out).astype(jnp.bfloat16)
    bo2 = bo.reshape(1, d_out).astype(jnp.float32)

    # ---- Kernel 2: flash attention (triangular grid) + fused out_proj ----
    out = pl.pallas_call(
        attn_kernel,
        out_shape=jax.ShapeDtypeStruct((B, Tp, d_out), x.dtype),
        grid_spec=pltpu.PrefetchScalarGridSpec(
            num_scalar_prefetch=2,
            grid=(B, n_tri),
            in_specs=[
                pl.BlockSpec((1, H, tq, hd),
                             lambda b, t, qi, ki: (b, 0, qi[t], 0)),   # Q heads
                pl.BlockSpec((1, H, tk, hd),
                             lambda b, t, qi, ki: (b, 1, ki[t], 0)),   # K heads
                pl.BlockSpec((1, H, tk, hd),
                             lambda b, t, qi, ki: (b, 2, ki[t], 0)),   # V heads
                pl.BlockSpec((H, hd, d_out), lambda b, t, qi, ki: (0, 0, 0)),
                pl.BlockSpec((1, d_out), lambda b, t, qi, ki: (0, 0)),
            ],
            out_specs=pl.BlockSpec((1, tq, d_out),
                                   lambda b, t, qi, ki: (b, qi[t], 0)),
            scratch_shapes=[
                pltpu.VMEM((H, tq, 1), jnp.float32),   # running max
                pltpu.VMEM((H, tq, 1), jnp.float32),   # running denom
                pltpu.VMEM((H, tq, hd), jnp.float32),  # unnormalized context
            ],
        ),
        compiler_params=pltpu.CompilerParams(
            dimension_semantics=("parallel", "arbitrary"),
            vmem_limit_bytes=64 * 1024 * 1024),
    )(qi_tbl, ki_tbl, qkv, qkv, qkv, wo_r, bo2)

    return out[:, :T] if Tp != T else out


def reference_mha(x, wq_t, wk_t, wv_t, wo_t, bo, num_heads):
    """Pure-JAX f32 reference mirroring the PyTorch forward (eval / no dropout)."""
    B, T, d_in = x.shape
    d_out = wq_t.shape[1]
    hd = d_out // num_heads
    q = (x @ wq_t).reshape(B, T, num_heads, hd).transpose(0, 2, 1, 3)
    k = (x @ wk_t).reshape(B, T, num_heads, hd).transpose(0, 2, 1, 3)
    v = (x @ wv_t).reshape(B, T, num_heads, hd).transpose(0, 2, 1, 3)
    s = jnp.einsum("bhqd,bhkd->bhqk", q, k) / math.sqrt(hd)
    mask = jnp.triu(jnp.ones((T, T), dtype=bool), k=1)
    s = jnp.where(mask, -jnp.inf, s)
    p = jax.nn.softmax(s, axis=-1)
    ctx = jnp.einsum("bhqk,bhkd->bqhd", p, v).reshape(B, T, d_out)
    return ctx @ wo_t + bo


if __name__ == "__main__":
    # Small shapes consistent with the module's forward.
    B, T, d_in, d_out, num_heads = 2, 8, 32, 32, 4

    key = jax.random.PRNGKey(0)
    kx, kq, kk, kv, ko, kb = jax.random.split(key, 6)

    x = jax.random.normal(kx, (B, T, d_in), dtype=jnp.float32)

    # Deterministic init (PyTorch Linear weight is (out, in); stored here
    # pre-transposed to (in, out)). qkv_bias=False -> no q/k/v bias.
    scale_in = 1.0 / math.sqrt(d_in)
    scale_out = 1.0 / math.sqrt(d_out)
    wq_t = jax.random.uniform(kq, (d_in, d_out), minval=-scale_in, maxval=scale_in)
    wk_t = jax.random.uniform(kk, (d_in, d_out), minval=-scale_in, maxval=scale_in)
    wv_t = jax.random.uniform(kv, (d_in, d_out), minval=-scale_in, maxval=scale_in)
    wo_t = jax.random.uniform(ko, (d_out, d_out), minval=-scale_out, maxval=scale_out)
    bo = jax.random.uniform(kb, (1, d_out), minval=-scale_out, maxval=scale_out)

    out = mha_forward(x, wq_t, wk_t, wv_t, wo_t, bo, num_heads)
    out = jax.block_until_ready(out)

    ref = reference_mha(x, wq_t, wk_t, wv_t, wo_t, bo, num_heads)
    assert out.shape == (B, T, d_out)
    # bf16 MXU operands -> compare with bf16-level tolerance.
    assert jnp.allclose(out, ref, atol=3e-2, rtol=3e-2), "mismatch vs reference"

    print("KERNEL_OK")
</pallas_src>

<mosaic_0001>
module attributes {stable_mosaic.version = 11 : i64} {
  func.func @qkv_proj_kernel(%arg0: i32, %arg1: i32, %arg2: i32, %arg3: i32, %arg4: memref<1x8x32xbf16, #tpu.memory_space<vmem>>, %arg5: memref<1x32x8xbf16, #tpu.memory_space<vmem>>, %arg6: memref<1x1x8x8xbf16, #tpu.memory_space<vmem>>, %arg7: memref<8x8xf32, #tpu.memory_space<vmem>>) attributes {dimension_semantics = [#tpu.dimension_semantics<parallel>, #tpu.dimension_semantics<parallel>, #tpu.dimension_semantics<parallel>, #tpu.dimension_semantics<arbitrary>], iteration_bounds = array<i64: 2, 1, 12, 1>, scalar_prefetch = 0 : i64, scratch_operands = 1 : i64, tpu.core_type = #tpu.core_type<tc>, window_params = [{transform_indices = @transform_0, window_bounds = array<i64: 1, 8, 32>}, {transform_indices = @transform_1, window_bounds = array<i64: 1, 32, 8>}, {transform_indices = @transform_2, window_bounds = array<i64: 1, 1, 8, 8>}]} {
    %c0_i32 = arith.constant 0 : i32
    %0 = arith.cmpi eq, %arg3, %c0_i32 : i32
    %1 = arith.extui %0 : i1 to i32
    %c0_i32_0 = arith.constant 0 : i32
    %2 = arith.cmpi ne, %1, %c0_i32_0 : i32
    scf.if %2 {
      %cst_12 = arith.constant 0.000000e+00 : f32
      %14 = vector.broadcast %cst_12 : f32 to vector<8x8xf32>
      %c0_13 = arith.constant 0 : index
      %c0_14 = arith.constant 0 : index
      %15 = vector.load %arg7[%c0_13, %c0_14] : memref<8x8xf32, #tpu.memory_space<vmem>>, vector<8x8xf32>
      tpu.vector_store %arg7[%c0_13, %c0_14], %14 {strides = array<i32>} : memref<8x8xf32, #tpu.memory_space<vmem>>, vector<8x8xf32>,
    } else {
    }
    %c0 = arith.constant 0 : index
    %c0_1 = arith.constant 0 : index
    %3 = vector.load %arg7[%c0, %c0_1] : memref<8x8xf32, #tpu.memory_space<vmem>>, vector<8x8xf32>
    %c0_2 = arith.constant 0 : index
    %c0_3 = arith.constant 0 : index
    %c0_4 = arith.constant 0 : index
    %4 = vector.load %arg4[%c0_2, %c0_3, %c0_4] : memref<1x8x32xbf16, #tpu.memory_space<vmem>>, vector<1x8x32xbf16>
    %5 = vector.shape_cast %4 : vector<1x8x32xbf16> to vector<8x32xbf16>
    %c0_5 = arith.constant 0 : index
    %c0_6 = arith.constant 0 : index
    %c0_7 = arith.constant 0 : index
    %6 = vector.load %arg5[%c0_5, %c0_6, %c0_7] : memref<1x32x8xbf16, #tpu.memory_space<vmem>>, vector<1x32x8xbf16>
    %7 = vector.shape_cast %6 : vector<1x32x8xbf16> to vector<32x8xbf16>
    %cst = arith.constant dense<0.000000e+00> : vector<8x8xf32>
    %8 = tpu.matmul %5, %7, %cst {dimension_numbers = #tpu.dot_dimension_numbers<[1], [0], [0], [1], [0, 0, 1, 1], [], []>} : vector<8x32xbf16>, vector<32x8xbf16>, vector<8x8xf32> -> vector<8x8xf32>
    %9 = arith.addf %3, %8 : vector<8x8xf32>
    %c0_8 = arith.constant 0 : index
    %c0_9 = arith.constant 0 : index
    %10 = vector.load %arg7[%c0_8, %c0_9] : memref<8x8xf32, #tpu.memory_space<vmem>>, vector<8x8xf32>
    tpu.vector_store %arg7[%c0_8, %c0_9], %9 {strides = array<i32>} : memref<8x8xf32, #tpu.memory_space<vmem>>, vector<8x8xf32>,
    %c0_i32_10 = arith.constant 0 : i32
    %11 = arith.cmpi eq, %arg3, %c0_i32_10 : i32
    %12 = arith.extui %11 : i1 to i32
    %c0_i32_11 = arith.constant 0 : i32
    %13 = arith.cmpi ne, %12, %c0_i32_11 : i32
    scf.if %13 {
      %c0_12 = arith.constant 0 : index
      %c0_13 = arith.constant 0 : index
      %14 = vector.load %arg7[%c0_12, %c0_13] : memref<8x8xf32, #tpu.memory_space<vmem>>, vector<8x8xf32>
      %15 = arith.truncf %14 : vector<8x8xf32> to vector<8x8xbf16>
      %c0_14 = arith.constant 0 : index
      %c0_15 = arith.constant 0 : index
      %c0_16 = arith.constant 0 : index
      %c0_17 = arith.constant 0 : index
      %16 = vector.load %arg6[%c0_14, %c0_15, %c0_16, %c0_17] : memref<1x1x8x8xbf16, #tpu.memory_space<vmem>>, vector<1x1x8x8xbf16>
      %17 = vector.shape_cast %16 : vector<1x1x8x8xbf16> to vector<8x8xbf16>
      %18 = vector.shape_cast %15 : vector<8x8xbf16> to vector<1x1x8x8xbf16>
      tpu.vector_store %arg6[%c0_14, %c0_15, %c0_16, %c0_17], %18 {strides = array<i32>} : memref<1x1x8x8xbf16, #tpu.memory_space<vmem>>, vector<1x1x8x8xbf16>,
    } else {
    }
    return
  }
  func.func @transform_0(%arg0: i32, %arg1: i32, %arg2: i32, %arg3: i32) -> (i32, i32, i32) {
    %c0_i32 = arith.constant 0 : i32
    return %arg0, %arg1, %arg3 : i32, i32, i32
  }
  func.func @transform_1(%arg0: i32, %arg1: i32, %arg2: i32, %arg3: i32) -> (i32, i32, i32) {
    %c0_i32 = arith.constant 0 : i32
    %c0_i32_0 = arith.constant 0 : i32
    return %arg2, %arg3, %c0_i32 : i32, i32, i32
  }
  func.func @transform_2(%arg0: i32, %arg1: i32, %arg2: i32, %arg3: i32) -> (i32, i32, i32, i32) {
    %c0_i32 = arith.constant 0 : i32
    %c0_i32_0 = arith.constant 0 : i32
    return %arg0, %arg2, %arg1, %c0_i32 : i32, i32, i32, i32
  }
}

</mosaic_0001>

<llo_original>
// kernel: tpu_custom_call.1
$region0: #{tpu_custom_call.1}
  #allocation0 [shape = 'u32[]', space=smem, size = 0x4, offset = 0x4, fixed_abs, tag = 'smem constant byte address 0x4 - core index']
  #allocation1 [shape = 'u32[144,128]{1,0:T(1,128)}', space=vmem, size = 0x12000, scoped, tag = 'internal scratch']
  #allocation2 [shape = 'f32[8,8]{1,0:T(8,128)}', space=vmem, size = 0x1000, scoped, tag = 'scratch operand']
  %s0 = inlined_call_operand.hbm [shape: bf16[2,8,32], index: 0, kind: input, shape index: {}]
  %s1 = inlined_call_operand.hbm [shape: bf16[12,32,8], index: 1, kind: input, shape index: {}]
  %s2 = inlined_call_operand.hbm [shape: bf16[2,12,8,8], index: 2, kind: output, shape index: {}]
  %s3 = sld [smem:[#allocation0]]
  $region57: #{tpu_custom_call.1} parent=0
    _
  %s5 = ssub.s32 1, %s3
  %s6 = scalar_select 0, %s5, %s3
  $region1: #{tpu_custom_call.1} parent=0
    #allocation3 [shape = 'u8[4096]{0}', space=vmem, size = 0x1000, scoped, tag = 'input window, operand 0']
    #allocation4 [shape = 's32[2]{0}', space=sflag, size = 0x8, scoped, tag = 'scoped memory for tpu_custom_call.1']
    #allocation5 [shape = 's32[2]{0}', space=sflag, size = 0x8, scoped, tag = 'scoped memory for tpu_custom_call.1']
    #allocation6 [shape = 'u8[16384]{0}', space=vmem, size = 0x4000, scoped, tag = 'input window, operand 1']
    #allocation7 [shape = 's32[2]{0}', space=sflag, size = 0x8, scoped, tag = 'scoped memory for tpu_custom_call.1']
    #allocation8 [shape = 'u8[4096]{0}', space=vmem, size = 0x1000, scoped, tag = 'output window, operand 0']
    %7 = vsyncpa [#allocation4], 0
    %s8 = scalar_lea.sflag [#allocation4], 1
    %9 = vsyncpa %s8, 0
    %10 = vsyncpa [#allocation7], 0
    %s11 = scalar_lea.sflag [#allocation7], 1
    %12 = vsyncpa %s11, 0
    %13 = vsyncpa [#allocation5], 0
    %s14 = scalar_lea.sflag [#allocation5], 1
    %15 = vsyncpa %s14, 0
    loop: start=0, step=1, limit=26
    $region2: #{tpu_custom_call.1} parent=1 // loop_pre_header
      _
    $region3: #{tpu_custom_call.1} parent=1 // loop_header
      %s17 = sphi 0, %s21
      %p18 = scmp.ge.s32.totalorder %s17, 26
      %s24 = sphi 0, %s50
      %s25 = sphi 0, %s46
      %s26 = sphi 0, %s42
      %s27 = sphi 0, %s38
      %s28 = sphi 0, %s24
      %s29 = sphi 0, %s25
      %s30 = sphi 0, %s26
      %s31 = sphi 0, %s27
      %s32 = sphi 0, %s28
      %s33 = sphi 0, %s29
      %s34 = sphi 0, %s30
      %s35 = sphi 0, %s31
      %s57 = sphi 0, %s59
      %s60 = sphi 0, %s57
      %s61 = sphi 0, %s60
      %s77 = sphi 0, %s61
      %s85 = sphi 0, %s87
      %s88 = sphi 0, %s85
      %s89 = sphi 0, %s88
      %s105 = sphi 0, %s89
      %s115 = sphi 0, %s117
      %s118 = sphi 0, %s115
      %s119 = sphi 0, %s118
      %s135 = sphi 0, %s119
    $region4: #{tpu_custom_call.1} parent=1 // loop_header_branch
      %20 = sbr.rel (%p18) target = $region8
    $region5: #{tpu_custom_call.1} parent=1 // loop_body
      %s22 = ssub.s32 %s17, 1
      %s23 = ssub.s32 %s17, 2
      %s36 = sadd.s32 1, %s27
      %p37 = scmp.ge.s32.totalorder %s36, 1
      %s38 = scalar_select %p37, 0, %s36
      %s39 = sadd.s32 1, %s26
      %s40 = scalar_select %p37, %s39, %s26
      %p41 = scmp.ge.s32.totalorder %s40, 12
      %s42 = scalar_select %p41, 0, %s40
      %s43 = sadd.s32 1, %s25
      %s44 = scalar_select %p41, %s43, %s25
      %p45 = scmp.ge.s32.totalorder %s44, 1
      %s46 = scalar_select %p45, 0, %s44
      %s47 = sadd.s32 1, %s24
      %s48 = scalar_select %p45, %s47, %s24
      %p49 = scmp.ge.s32.totalorder %s48, 2
      %s50 = scalar_select %p49, 0, %s48
      %s51 = ssub.s32 %s24, %s50
      %s52 = ssub.s32 %s25, %s46
      %s53 = sor.u32 %s51, %s52
      %s54 = ssub.s32 %s27, %s38
      %s55 = sor.u32 %s53, %s54
      %p56 = scmp.eq.s32.totalorder %s55, 0
      %s58 = sadd.s32 %s57, 1
      %s59 = scalar_select %p56, %s57, %s58
      %p62 = pneg %p56
      %p63 = scmp.eq.s32.totalorder %s17, 23
      %p64 = por %p62, %p63
      %p65 = scmp.ne.s32.totalorder %s57, %s60
      %p66 = scmp.eq.s32.totalorder %s17, 0
      %p67 = por %p65, %p66
      %p68 = scmp.ne.s32.totalorder %s57, %s60
      %p69 = scmp.eq.s32.totalorder %s22, 23
      %p70 = por %p68, %p69
      %p71 = scmp.ne.s32.totalorder %s60, %s61
      %p72 = scmp.eq.s32.totalorder %s22, 0
      %p73 = por %p71, %p72
      %p74 = scmp.ne.s32.totalorder %s60, %s61
      %p75 = scmp.eq.s32.totalorder %s23, 23
      %p76 = por %p74, %p75
      %p78 = scmp.ne.s32.totalorder %s61, %s77
      %p79 = scmp.eq.s32.totalorder %s23, 0
      %p80 = por %p78, %p79
      %s81 = ssub.s32 %s26, %s42
      %s82 = ssub.s32 %s27, %s38
      %s83 = sor.u32 %s81, %s82
      %p84 = scmp.eq.s32.totalorder %s83, 0
      %s86 = sadd.s32 %s85, 1
      %s87 = scalar_select %p84, %s85, %s86
      %p90 = pneg %p84
      %p91 = scmp.eq.s32.totalorder %s17, 23
      %p92 = por %p90, %p91
      %p93 = scmp.ne.s32.totalorder %s85, %s88
      %p94 = scmp.eq.s32.totalorder %s17, 0
      %p95 = por %p93, %p94
      %p96 = scmp.ne.s32.totalorder %s85, %s88
      %p97 = scmp.eq.s32.totalorder %s22, 23
      %p98 = por %p96, %p97
      %p99 = scmp.ne.s32.totalorder %s88, %s89
      %p100 = scmp.eq.s32.totalorder %s22, 0
      %p101 = por %p99, %p100
      %p102 = scmp.ne.s32.totalorder %s88, %s89
      %p103 = scmp.eq.s32.totalorder %s23, 23
      %p104 = por %p102, %p103
      %p106 = scmp.ne.s32.totalorder %s89, %s105
      %p107 = scmp.eq.s32.totalorder %s23, 0
      %p108 = por %p106, %p107
      %s109 = ssub.s32 %s24, %s50
      %s110 = ssub.s32 %s26, %s42
      %s111 = sor.u32 %s109, %s110
      %s112 = ssub.s32 %s25, %s46
      %s113 = sor.u32 %s111, %s112
      %p114 = scmp.eq.s32.totalorder %s113, 0
      %s116 = sadd.s32 %s115, 1
      %s117 = scalar_select %p114, %s115, %s116
      %p120 = pneg %p114
      %p121 = scmp.eq.s32.totalorder %s17, 23
      %p122 = por %p120, %p121
      %p123 = scmp.ne.s32.totalorder %s115, %s118
      %p124 = scmp.eq.s32.totalorder %s17, 0
      %p125 = por %p123, %p124
      %p126 = scmp.ne.s32.totalorder %s115, %s118
      %p127 = scmp.eq.s32.totalorder %s22, 23
      %p128 = por %p126, %p127
      %p129 = scmp.ne.s32.totalorder %s118, %s119
      %p130 = scmp.eq.s32.totalorder %s22, 0
      %p131 = por %p129, %p130
      %p132 = scmp.ne.s32.totalorder %s118, %s119
      %p133 = scmp.eq.s32.totalorder %s23, 23
      %p134 = por %p132, %p133
      %p136 = scmp.ne.s32.totalorder %s119, %s135
      %p137 = scmp.eq.s32.totalorder %s23, 0
      %p138 = por %p136, %p137
      %p139 = scmp.le.s32.totalorder 1, %s17
      %p140 = scmp.lt.s32.totalorder %s17, 25
      %p141 = pnand %p139, %p140
      %p142 = pneg %p141
      // Predicated region
      $region9: #{tpu_custom_call.1} parent=5 // pred_check
        _
      $region10: #{tpu_custom_call.1} parent=5 // pred_check_branch
        %144 = sbr.rel (%p141) target = $region12
      $region11: #{tpu_custom_call.1} parent=5 // pred_region
        %s145 = ssub.s32 %s17, 1
      $region12: #{tpu_custom_call.1} parent=5 // pred_fallthru
        _
      %p146 = scmp.lt.s32.totalorder %s17, 24
      // Predicated region
      $region13: #{tpu_custom_call.1} parent=5 // pred_check
        %p147 = pneg %p146
      $region14: #{tpu_custom_call.1} parent=5 // pred_check_branch
        %149 = sbr.rel (%p147) target = $region16
      $region15: #{tpu_custom_call.1} parent=5 // pred_region
        // Predicated region
        $region17: #{tpu_custom_call.1} parent=15 // pred_check
          %p150 = pneg %p67
        $region18: #{tpu_custom_call.1} parent=15 // pred_check_branch
          %152 = sbr.rel (%p150) target = $region20
        $region19: #{tpu_custom_call.1} parent=15 // pred_region
          %s153 = sand.u32 %s57, 1
          %s154 = scalar_lea.sflag [#allocation4], %s153
          %s155 = sand.u32 %s57, 1
          %s156 = smul.addr %s155, 4
          %s157 = scalar_lea.vmem [#allocation3], %s156
          %s159 = ssub.s32 64, 64
          %160 = vsyncadd %s154, %s159
          %s161 = sadd.s32 %s27, %s25
          %s162 = sadd.s32 %s161, %s24
          %s163 = smul.addr %s162, 64
          %s164 = scalar_lea.hbm %s0, %s163
          %s166 = sshll.u32 %s157, 4
          %s167 = int_to_ptr.vmem [resolvable:$true] %s166
          %169 = dma.hbm_to_vmem [thread:$0]  %s164, 64, %s167, %s154
        $region20: #{tpu_custom_call.1} parent=15 // pred_fallthru
          _
        // Predicated region
        $region21: #{tpu_custom_call.1} parent=15 // pred_check
          %p170 = pneg %p95
        $region22: #{tpu_custom_call.1} parent=15 // pred_check_branch
          %172 = sbr.rel (%p170) target = $region24
        $region23: #{tpu_custom_call.1} parent=15 // pred_region
          %s173 = sand.u32 %s85, 1
          %s174 = scalar_lea.sflag [#allocation7], %s173
          %s175 = sand.u32 %s85, 1
          %s176 = smul.addr %s175, 16
          %s177 = scalar_lea.vmem [#allocation6], %s176
          %s178 = smul.u32 4, %s27
          %s180 = ssub.s32 256, 256
          %181 = vsyncadd %s174, %s180
          %s182 = smul.addr %s26, 4
          %s183 = sadd.s32 %s178, %s182
          %s184 = smul.addr %s183, 64
          %s185 = scalar_lea.hbm %s1, %s184
          %s186 = sshll.u32 %s177, 4
          %s187 = int_to_ptr.vmem [resolvable:$true] %s186
          %192 = dma.hbm_to_vmem [thread:$0]  %s185, 256, %s187, %s174, 64, 64, 4
        $region24: #{tpu_custom_call.1} parent=15 // pred_fallthru
          _
      $region16: #{tpu_custom_call.1} parent=5 // pred_fallthru
        _
      %p193 = scmp.le.s32.totalorder 1, %s17
      %p194 = scmp.lt.s32.totalorder %s17, 25
      %p195 = pnand %p193, %p194
      %p196 = pneg %p195
      // Predicated region
      $region25: #{tpu_custom_call.1} parent=5 // pred_check
        _
      $region26: #{tpu_custom_call.1} parent=5 // pred_check_branch
        %198 = sbr.rel (%p195) target = $region28
      $region27: #{tpu_custom_call.1} parent=5 // pred_region
        %s199 = ssub.s32 %s17, 1
        %s200 = sand.u32 %s60, 1
        %s201 = scalar_lea.sflag [#allocation4], %s200
        %s202 = sand.u32 %s60, 1
        %s203 = smul.addr %s202, 4
        %s204 = scalar_lea.vmem [#allocation3], %s203
        // Predicated region
        $region29: #{tpu_custom_call.1} parent=27 // pred_check
          %p205 = pneg %p73
        $region30: #{tpu_custom_call.1} parent=27 // pred_check_branch
          %207 = sbr.rel (%p205) target = $region32
        $region31: #{tpu_custom_call.1} parent=27 // pred_region
          %208 = dma.done %s201, 64
        $region32: #{tpu_custom_call.1} parent=27 // pred_fallthru
          _
        %s209 = sand.u32 %s88, 1
        %s210 = scalar_lea.sflag [#allocation7], %s209
        %s211 = sand.u32 %s88, 1
        %s212 = smul.addr %s211, 16
        %s213 = scalar_lea.vmem [#allocation6], %s212
        // Predicated region
        $region33: #{tpu_custom_call.1} parent=27 // pred_check
          %p214 = pneg %p101
        $region34: #{tpu_custom_call.1} parent=27 // pred_check_branch
          %216 = sbr.rel (%p214) target = $region36
        $region35: #{tpu_custom_call.1} parent=27 // pred_region
          %217 = dma.done %s210, 256
        $region36: #{tpu_custom_call.1} parent=27 // pred_fallthru
          _
        %s218 = sand.u32 %s60, 1
        %s219 = scalar_lea.sflag [#allocation4], %s218
        %s220 = sand.u32 %s60, 1
        %s221 = smul.addr %s220, 4
        %s222 = scalar_lea.vmem [#allocation3], %s221
        %p223 = pneg %p73
        %p224 = pneg %p70
        %s225 = sand.u32 %s88, 1
        %s226 = scalar_lea.sflag [#allocation7], %s225
        %s227 = sand.u32 %s88, 1
        %s228 = smul.addr %s227, 16
        %s229 = scalar_lea.vmem [#allocation6], %s228
        %p230 = pneg %p101
        %p231 = pneg %p98
        %p232 = pneg %p131
        %p233 = pneg %p128
        %s234 = sand.u32 %s118, 1
        %s235 = scalar_lea.sflag [#allocation5], %s234
        %s236 = sand.u32 %s118, 1
        %s237 = smul.addr %s236, 4
        %s238 = scalar_lea.vmem [#allocation8], %s237
        %s239 = smul.u32 4, %s31
        %p241 = scmp.eq.s32.totalorder %s31, 0
        // Predicated region
        $region37: #{tpu_custom_call.1} parent=27 // pred_check
          %p242 = pneg %p241
        $region38: #{tpu_custom_call.1} parent=27 // pred_check_branch
          %244 = sbr.rel (%p242) target = $region40
        $region39: #{tpu_custom_call.1} parent=27 // pred_region
          %vm245 = vcmask 64512
          %246 = vst.msk [vmem:[#allocation2] sm:$0xff] %vm245, 0.0
        $region40: #{tpu_custom_call.1} parent=27 // pred_fallthru
          _
        %v247 = vld [vmem:[#allocation2] sm:$0xff]
        %v248 = vld [vmem:[%s204] sm:$0xf]
        %v249 = vld [vmem:[%s213] sm:$0xf]
        %v250 = vld [vmem:[%s213 + $0x4] sm:$0xf]
        %v251 = vld [vmem:[%s213 + $0x8] sm:$0xf]
        %v252 = vld [vmem:[%s213 + $0xc] sm:$0xf]
        %v257 = vunpack.c.l.b16 %v249
        %v258 = vunpack.c.l.b16 %v250
        %v259 = vunpack.c.l.b16 %v251
        %v260 = vunpack.c.l.b16 %v252
        %v261 = vpack.c.b16 %v258, %v257
        %v262 = vpack.c.b16 %v260, %v259
        %vm265 = vcmask 261120
        %v267 = vsel %vm265, %v248, 0
        %269 = vmatprep.subr.bf16.mxu0 0
        %270 = vmatpush1.bf16.msra.mxu0 %v261
        %271 = vmatprep.subr.bf16.mxu0 0
        %272 = vmatpush1.bf16.msra.mxu0 %v262
        %273 = vmatprep.subr.bf16.mxu0 0
        %274 = vmatpush1.bf16.msra.mxu0 0
        %275 = vmatprep.subr.bf16.mxu0 0
        %276 = vmatpush1.bf16.msra.mxu0 0
        %277 = vmatprep.subr.bf16.mxu0 0
        %278 = vmatpush1.bf16.msra.mxu0 0
        %279 = vmatprep.subr.bf16.mxu0 0
        %280 = vmatpush1.bf16.msra.mxu0 0
        %281 = vmatprep.subr.bf16.mxu0 0
        %282 = vmatpush1.bf16.msra.mxu0 0
        %283 = vmatprep.subr.bf16.mxu0 0
        %284 = vmatpush1.bf16.msra.mxu0 0
        %285 = vmatprep.subr.bf16.mxu0 0
        %286 = vmatpush1.bf16.msra.mxu0 0
        %287 = vmatprep.subr.bf16.mxu0 0
        %288 = vmatpush1.bf16.msra.mxu0 0
        %289 = vmatprep.subr.bf16.mxu0 0
        %290 = vmatpush1.bf16.msra.mxu0 0
        %291 = vmatprep.subr.bf16.mxu0 0
        %292 = vmatpush1.bf16.msra.mxu0 0
        %293 = vmatprep.subr.bf16.mxu0 0
        %294 = vmatpush1.bf16.msra.mxu0 0
        %295 = vmatprep.subr.bf16.mxu0 0
        %296 = vmatpush1.bf16.msra.mxu0 0
        %297 = vmatprep.subr.bf16.mxu0 0
        %298 = vmatpush1.bf16.msra.mxu0 0
        %299 = vmatprep.subr.bf16.mxu0 0
        %300 = vmatpush1.bf16.msra.mxu0 0
        %301 = vmatprep.mubr.bf16.mxu0 0
        %302 = vmatmul.mubr.bf16.gmra.mrb[0].mxu0 %v267
        %v303 = vpop.f32.mrb[0].mxu0
        %v304 = vadd.f32 0.0, %v303
        %v305 = vpop.f32.mrb[0].mxu0
        %v306 = vpop.f32.mrb[0].mxu0
        %v307 = vpop.f32.mrb[0].mxu0
        %308 = vdwg.mxu0
        %v309 = vadd.f32 %v247, %v304
        %vm310 = vcmask 64512
        %311 = vst.msk [vmem:[#allocation2] sm:$0xff] %vm310, %v309
        // Predicated region
        $region41: #{tpu_custom_call.1} parent=27 // pred_check
          %p312 = pneg %p241
        $region42: #{tpu_custom_call.1} parent=27 // pred_check_branch
          %314 = sbr.rel (%p312) target = $region44
        $region43: #{tpu_custom_call.1} parent=27 // pred_region
          %v315 = vld [vmem:[#allocation2] sm:$0xff]
          %v316 = vpack.c.bf16 %v315, %v315
          %vm317 = vcmask 60416
          %318 = vst.msk [vmem:[%s238] sm:$0xf] %vm317, %v316
        $region44: #{tpu_custom_call.1} parent=27 // pred_fallthru
          _
        %s319 = sand.u32 %s118, 1
        %s320 = scalar_lea.sflag [#allocation5], %s319
        %s321 = sand.u32 %s118, 1
        %s322 = smul.addr %s321, 4
        %s323 = scalar_lea.vmem [#allocation8], %s322
        // Predicated region
        $region45: #{tpu_custom_call.1} parent=27 // pred_check
          %p324 = pneg %p128
        $region46: #{tpu_custom_call.1} parent=27 // pred_check_branch
          %326 = sbr.rel (%p324) target = $region48
        $region47: #{tpu_custom_call.1} parent=27 // pred_region
          %s328 = ssub.s32 64, 64
          %329 = vsyncadd %s320, %s328
          %s330 = sadd.s32 %s29, %s30
          %s331 = smul.addr %s28, 12
          %s332 = sadd.s32 %s330, %s331
          %s333 = smul.addr %s332, 64
          %s334 = scalar_lea.hbm %s2, %s333
          %s336 = sshll.u32 %s323, 4
          %s337 = int_to_ptr.vmem [resolvable:$true] %s336
          %339 = dma.vmem_to_hbm [thread:$0]  %s337, 64, %s334, %s320
        $region48: #{tpu_custom_call.1} parent=27 // pred_fallthru
          _
      $region28: #{tpu_custom_call.1} parent=5 // pred_fallthru
        _
      %p340 = scmp.le.s32.totalorder 2, %s17
      // Predicated region
      $region49: #{tpu_custom_call.1} parent=5 // pred_check
        %p341 = pneg %p340
      $region50: #{tpu_custom_call.1} parent=5 // pred_check_branch
        %343 = sbr.rel (%p341) target = $region52
      $region51: #{tpu_custom_call.1} parent=5 // pred_region
        %s344 = ssub.s32 %s17, 2
        // Predicated region
        $region53: #{tpu_custom_call.1} parent=51 // pred_check
          %p345 = pneg %p134
        $region54: #{tpu_custom_call.1} parent=51 // pred_check_branch
          %347 = sbr.rel (%p345) target = $region56
        $region55: #{tpu_custom_call.1} parent=51 // pred_region
          %s348 = sand.u32 %s119, 1
          %s349 = scalar_lea.sflag [#allocation5], %s348
          %s350 = sand.u32 %s119, 1
          %s351 = smul.addr %s350, 4
          %s352 = scalar_lea.vmem [#allocation8], %s351
          %353 = dma.done %s349, 64
        $region56: #{tpu_custom_call.1} parent=51 // pred_fallthru
          _
      $region52: #{tpu_custom_call.1} parent=5 // pred_fallthru
        _
    $region6: #{tpu_custom_call.1} parent=1 // loop_footer
      %s21 = sadd.s32 1, %s17
    $region7: #{tpu_custom_call.1} parent=1 // loop_footer_branch
      %16 = sbr.rel target = $region3
    $region8: #{tpu_custom_call.1} parent=1 // loop_exit
      _
    %354 = vsyncpa [#allocation4], 1
    %s355 = scalar_lea.sflag [#allocation4], 1
    %356 = vsyncpa %s355, 1
    %357 = vsyncpa [#allocation7], 1
    %s358 = scalar_lea.sflag [#allocation7], 1
    %359 = vsyncpa %s358, 1
    %360 = vsyncpa [#allocation5], 1
    %s361 = scalar_lea.sflag [#allocation5], 1
    %362 = vsyncpa %s361, 1

</llo_original>
